<compile_context>
chip_gen: v7x
topology: tpu7x:2x2x1
jax: 0.10.0
libtpu: 0.0.40
codegen_flags: <defaults>
</compile_context>

<pallas_src>
import functools

import jax
import jax.numpy as jnp
from jax.experimental import pallas as pl
from jax.experimental.pallas import tpu as pltpu

_NUM_CORES = 2  # v7x megacore split; harmless (sequential) on 1-TC v5e/v6e.


def _choose_block_rows(n, c):
    """Pick a row-tile size: full array if small, else ~4 MiB of f32 logits."""
    g = 16  # sublane granularity that covers f32 (8) and bf16 (16) packing
    if n <= 512:
        return n
    target_bytes = 4 * 1024 * 1024
    tn = target_bytes // max(c * 4, 1)
    tn = max(g, min(2048, (tn // g) * g))
    # Keep the block no larger than the array's row extent (rounded down to g)
    # so there is at least one full block plus a masked partial tail.
    tn = min(tn, (n // g) * g)
    return max(g, tn)


def _bias_loss_kernel(x_ref, t_ref, v_ref, out_ref, *, alpha, beta, reduction,
                      n_rows, block_rows, tiles_per_core):
    x = x_ref[...].astype(jnp.float32)        # (TN, C) logits, upcast in-kernel
    t = t_ref[...]                            # (TN, 1) int32 targets
    v = v_ref[...].astype(jnp.float32)        # (TN, 1) "various"

    # Numerically stable log-softmax pieces — only what the loss needs.
    m = jnp.max(x, axis=-1, keepdims=True)                       # (TN, 1)
    xs = x - m                                                   # (TN, C)
    lse = jnp.log(jnp.sum(jnp.exp(xs), axis=-1, keepdims=True))  # (TN, 1)

    # log_softmax[row, target[row]] via lane-iota select + reduce; no full
    # one-hot or log_softmax tile is materialized.
    cols = jax.lax.broadcasted_iota(jnp.int32, x.shape, 1)
    target_xs = jnp.sum(jnp.where(cols == t, xs, 0.0),
                        axis=-1, keepdims=True)                  # (TN, 1)

    z = jnp.exp(v) * alpha - beta              # per-sample bias weight, (TN, 1)
    loss = -z * (target_xs - lse)              # (TN, 1)

    if reduction == "none":
        out_ref[...] = loss
    else:
        # 2D grid: (core, row-tile). Mask tail / duplicated (clamped) tiles so
        # they contribute exactly 0 to the per-core partial sum.
        ci = pl.program_id(0)
        ji = pl.program_id(1)
        tile_idx = ci * tiles_per_core + ji
        rows = tile_idx * block_rows + jax.lax.broadcasted_iota(
            jnp.int32, loss.shape, 0)
        loss = jnp.where(rows < n_rows, loss, 0.0)

        @pl.when(ji == 0)
        def _():
            out_ref[...] = jnp.zeros_like(out_ref)

        out_ref[...] += jnp.sum(loss)          # accumulate per-core partial sum


def bias_loss(inputs, targets, various, *, alpha=0.0, beta=0.0,
              reduction="mean", block_rows=None):
    """Pallas implementation of BiasLoss.forward.

    inputs:  (N, C) float logits (f32 or bf16 — passed through uncast)
    targets: (N,)   int class indices
    various: (N,) or (N, 1) float
    """
    if reduction not in ("mean", "sum", "none"):
        raise ValueError(f"unknown reduction: {reduction}")

    n, c = inputs.shape
    targets2d = targets.reshape(n, 1).astype(jnp.int32)
    various2d = various.reshape(n, 1).astype(jnp.float32)

    tn = block_rows if block_rows is not None else _choose_block_rows(n, c)
    n_tiles = pl.cdiv(n, tn)

    if reduction == "none":
        grid = (n_tiles,)
        in_specs = [
            pl.BlockSpec((tn, c), lambda i: (i, 0)),
            pl.BlockSpec((tn, 1), lambda i: (i, 0)),
            pl.BlockSpec((tn, 1), lambda i: (i, 0)),
        ]
        out_specs = pl.BlockSpec((tn, 1), lambda i: (i, 0))
        out_shape = jax.ShapeDtypeStruct((n, 1), jnp.float32)
        dims = ("parallel",)
        tiles_per_core = n_tiles
    else:
        tiles_per_core = pl.cdiv(n_tiles, _NUM_CORES)
        last_tile = n_tiles - 1

        def in_map(ci, ji):
            # Clamp so duplicated trailing iterations re-read a valid tile;
            # the in-kernel row mask zeroes their contribution.
            return (jnp.minimum(ci * tiles_per_core + ji, last_tile), 0)

        grid = (_NUM_CORES, tiles_per_core)
        in_specs = [
            pl.BlockSpec((tn, c), in_map),
            pl.BlockSpec((tn, 1), in_map),
            pl.BlockSpec((tn, 1), in_map),
        ]
        # One lane-dense (1, 128) partial-sum block per core.
        out_specs = pl.BlockSpec((1, 128), lambda ci, ji: (0, ci))
        out_shape = jax.ShapeDtypeStruct((1, _NUM_CORES * 128), jnp.float32)
        dims = ("parallel", "arbitrary")

    kernel = functools.partial(
        _bias_loss_kernel,
        alpha=alpha, beta=beta, reduction=reduction,
        n_rows=n, block_rows=tn, tiles_per_core=tiles_per_core,
    )

    out = pl.pallas_call(
        kernel,
        out_shape=out_shape,
        grid_spec=pltpu.PrefetchScalarGridSpec(
            num_scalar_prefetch=0,
            grid=grid,
            in_specs=in_specs,
            out_specs=out_specs,
        ),
        compiler_params=pltpu.CompilerParams(
            dimension_semantics=dims,
            vmem_limit_bytes=48 * 1024 * 1024,
        ),
    )(inputs, targets2d, various2d)

    if reduction == "none":
        return out[:, 0]
    total = out[0, ::128].sum()               # add the per-core partials
    if reduction == "mean":
        total = total / jnp.float32(n)
    return total


def _bias_loss_ref(inputs, targets, various, *, alpha, beta, reduction):
    """Pure-JAX reference mirroring the PyTorch forward."""
    n, c = inputs.shape
    onehot = jax.nn.one_hot(targets, c, dtype=jnp.float32)
    log_sm = jax.nn.log_softmax(inputs.astype(jnp.float32), axis=-1)
    z = jnp.exp(various.reshape(n, 1).astype(jnp.float32)) * alpha - beta
    loss = -(z * onehot * log_sm).sum(-1)
    if reduction == "sum":
        return loss.sum()
    if reduction == "mean":
        return loss.mean()
    return loss


if __name__ == "__main__":
    key = jax.random.PRNGKey(0)
    k1, k2, k3 = jax.random.split(key, 3)

    # Small primary shapes, non-default alpha/beta (defaults 0,0 give zero loss).
    N, C = 8, 32
    inputs = jax.random.normal(k1, (N, C), dtype=jnp.float32)
    targets = jax.random.randint(k2, (N,), 0, C, dtype=jnp.int32)
    various = jax.random.normal(k3, (N,), dtype=jnp.float32) * 0.1
    alpha, beta = 0.5, 0.3

    for reduction in ("mean", "sum", "none"):
        out = jax.block_until_ready(
            bias_loss(inputs, targets, various,
                      alpha=alpha, beta=beta, reduction=reduction))
        ref = _bias_loss_ref(inputs, targets, various,
                             alpha=alpha, beta=beta, reduction=reduction)
        assert jnp.allclose(out, ref, rtol=1e-5, atol=1e-5), (reduction, out, ref)

    # Tiled path with a ragged tail in bf16: exercises the row grid, the
    # tail-row masking and the 2-core partial-sum split.
    N2, C2 = 1153, 256
    kk1, kk2, kk3 = jax.random.split(jax.random.PRNGKey(1), 3)
    x2 = jax.random.normal(kk1, (N2, C2), dtype=jnp.bfloat16)
    t2 = jax.random.randint(kk2, (N2,), 0, C2, dtype=jnp.int32)
    v2 = jax.random.normal(kk3, (N2,), dtype=jnp.float32) * 0.1

    out2 = jax.block_until_ready(
        bias_loss(x2, t2, v2, alpha=alpha, beta=beta, reduction="mean"))
    ref2 = _bias_loss_ref(x2, t2, v2, alpha=alpha, beta=beta, reduction="mean")
    assert jnp.allclose(out2, ref2, rtol=1e-3, atol=1e-3), (out2, ref2)

    print("KERNEL_OK")
</pallas_src>

<mosaic_0001>
module attributes {stable_mosaic.version = 11 : i64} {
  func.func @_bias_loss_kernel(%arg0: i32, %arg1: i32, %arg2: memref<8x32xf32, #tpu.memory_space<vmem>>, %arg3: memref<8x1xi32, #tpu.memory_space<vmem>>, %arg4: memref<8x1xf32, #tpu.memory_space<vmem>>, %arg5: memref<1x128xf32, #tpu.memory_space<vmem>>) attributes {dimension_semantics = [#tpu.dimension_semantics<parallel>, #tpu.dimension_semantics<arbitrary>], iteration_bounds = array<i64: 2, 1>, scalar_prefetch = 0 : i64, scratch_operands = 0 : i64, tpu.core_type = #tpu.core_type<tc>, window_params = [{transform_indices = @transform_0, window_bounds = array<i64: 8, 32>}, {transform_indices = @transform_1, window_bounds = array<i64: 8, 1>}, {transform_indices = @transform_2, window_bounds = array<i64: 8, 1>}, {transform_indices = @transform_3, window_bounds = array<i64: 1, 128>}]} {
    %c0 = arith.constant 0 : index
    %c0_0 = arith.constant 0 : index
    %0 = vector.load %arg2[%c0, %c0_0] : memref<8x32xf32, #tpu.memory_space<vmem>>, vector<8x32xf32>
    %c0_1 = arith.constant 0 : index
    %c0_2 = arith.constant 0 : index
    %1 = vector.load %arg3[%c0_1, %c0_2] : memref<8x1xi32, #tpu.memory_space<vmem>>, vector<8x1xi32>
    %c0_3 = arith.constant 0 : index
    %c0_4 = arith.constant 0 : index
    %2 = vector.load %arg4[%c0_3, %c0_4] : memref<8x1xf32, #tpu.memory_space<vmem>>, vector<8x1xf32>
    %cst = arith.constant dense<0xFF800000> : vector<8xf32>
    %3 = vector.multi_reduction <maximumf>, %0, %cst [1] : vector<8x32xf32> to vector<8xf32>
    %4 = vector.shape_cast %3 : vector<8xf32> to vector<8x1xf32>
    %5 = vector.broadcast %4 : vector<8x1xf32> to vector<8x32xf32>
    %6 = arith.subf %0, %5 : vector<8x32xf32>
    %7 = math.exp %6 : vector<8x32xf32>
    %cst_5 = arith.constant dense<0.000000e+00> : vector<8xf32>
    %8 = vector.multi_reduction <add>, %7, %cst_5 [1] : vector<8x32xf32> to vector<8xf32>
    %9 = vector.shape_cast %8 : vector<8xf32> to vector<8x1xf32>
    %10 = math.log %9 : vector<8x1xf32>
    %11 = tpu.iota {dimensions = array<i32: 1>} : vector<8x32xi32>
    %12 = vector.broadcast %1 : vector<8x1xi32> to vector<8x32xi32>
    %13 = arith.cmpi eq, %11, %12 : vector<8x32xi32>
    %cst_6 = arith.constant 0.000000e+00 : f32
    %14 = vector.broadcast %cst_6 : f32 to vector<8x32xf32>
    %15 = arith.select %13, %6, %14 : vector<8x32xi1>, vector<8x32xf32>
    %cst_7 = arith.constant dense<0.000000e+00> : vector<8xf32>
    %16 = vector.multi_reduction <add>, %15, %cst_7 [1] : vector<8x32xf32> to vector<8xf32>
    %17 = vector.shape_cast %16 : vector<8xf32> to vector<8x1xf32>
    %18 = math.exp %2 : vector<8x1xf32>
    %cst_8 = arith.constant 5.000000e-01 : f32
    %19 = vector.broadcast %cst_8 : f32 to vector<8x1xf32>
    %20 = arith.mulf %18, %19 : vector<8x1xf32>
    %cst_9 = arith.constant 3.000000e-01 : f32
    %21 = vector.broadcast %cst_9 : f32 to vector<8x1xf32>
    %22 = arith.subf %20, %21 : vector<8x1xf32>
    %cst_10 = arith.constant 0.000000e+00 : f32
    %23 = vector.broadcast %cst_10 : f32 to vector<8x1xf32>
    %24 = arith.subf %23, %22 : vector<8x1xf32>
    %25 = arith.subf %17, %10 : vector<8x1xf32>
    %26 = arith.mulf %24, %25 : vector<8x1xf32>
    %c1_i32 = arith.constant 1 : i32
    %27 = arith.muli %arg0, %c1_i32 : i32
    %28 = arith.addi %27, %arg1 : i32
    %c8_i32 = arith.constant 8 : i32
    %29 = arith.muli %28, %c8_i32 : i32
    %30 = tpu.iota {dimensions = array<i32: 0>} : vector<8x1xi32>
    %31 = vector.broadcast %29 : i32 to vector<8x1xi32>
    %32 = arith.addi %31, %30 : vector<8x1xi32>
    %c8_i32_11 = arith.constant 8 : i32
    %33 = vector.broadcast %c8_i32_11 : i32 to vector<8x1xi32>
    %34 = arith.cmpi slt, %32, %33 : vector<8x1xi32>
    %cst_12 = arith.constant 0.000000e+00 : f32
    %35 = vector.broadcast %cst_12 : f32 to vector<8x1xf32>
    %36 = arith.select %34, %26, %35 : vector<8x1xi1>, vector<8x1xf32>
    %c0_i32 = arith.constant 0 : i32
    %37 = arith.cmpi eq, %arg1, %c0_i32 : i32
    %38 = arith.extui %37 : i1 to i32
    %c0_i32_13 = arith.constant 0 : i32
    %39 = arith.cmpi ne, %38, %c0_i32_13 : i32
    scf.if %39 {
      %cst_19 = arith.constant 0.000000e+00 : f32
      %48 = vector.broadcast %cst_19 : f32 to vector<1x128xf32>
      %c0_20 = arith.constant 0 : index
      %c0_21 = arith.constant 0 : index
      %49 = vector.load %arg5[%c0_20, %c0_21] : memref<1x128xf32, #tpu.memory_space<vmem>>, vector<1x128xf32>
      tpu.vector_store %arg5[%c0_20, %c0_21], %48 {strides = array<i32>} : memref<1x128xf32, #tpu.memory_space<vmem>>, vector<1x128xf32>,
    } else {
    }
    %c0_14 = arith.constant 0 : index
    %c0_15 = arith.constant 0 : index
    %40 = vector.load %arg5[%c0_14, %c0_15] : memref<1x128xf32, #tpu.memory_space<vmem>>, vector<1x128xf32>
    %41 = vector.shape_cast %36 : vector<8x1xf32> to vector<1x8x1xf32>
    %cst_16 = arith.constant dense<0.000000e+00> : vector<1xf32>
    %42 = vector.multi_reduction <add>, %41, %cst_16 [1, 2] : vector<1x8x1xf32> to vector<1xf32>
    %43 = vector.shape_cast %42 : vector<1xf32> to vector<1x1x1xf32>
    %44 = vector.extract %43[0, 0, 0] : f32 from vector<1x1x1xf32>
    %45 = vector.broadcast %44 : f32 to vector<1x128xf32>
    %46 = arith.addf %40, %45 : vector<1x128xf32>
    %c0_17 = arith.constant 0 : index
    %c0_18 = arith.constant 0 : index
    %47 = vector.load %arg5[%c0_17, %c0_18] : memref<1x128xf32, #tpu.memory_space<vmem>>, vector<1x128xf32>
    tpu.vector_store %arg5[%c0_17, %c0_18], %46 {strides = array<i32>} : memref<1x128xf32, #tpu.memory_space<vmem>>, vector<1x128xf32>,
    return
  }
  func.func @transform_0(%arg0: i32, %arg1: i32) -> (i32, i32) {
    %c1_i32 = arith.constant 1 : i32
    %0 = arith.muli %arg0, %c1_i32 : i32
    %1 = arith.addi %0, %arg1 : i32
    %c0_i32 = arith.constant 0 : i32
    %2 = arith.minsi %1, %c0_i32 : i32
    %c0_i32_0 = arith.constant 0 : i32
    %c0_i32_1 = arith.constant 0 : i32
    return %2, %c0_i32_0 : i32, i32
  }
  func.func @transform_1(%arg0: i32, %arg1: i32) -> (i32, i32) {
    %c1_i32 = arith.constant 1 : i32
    %0 = arith.muli %arg0, %c1_i32 : i32
    %1 = arith.addi %0, %arg1 : i32
    %c0_i32 = arith.constant 0 : i32
    %2 = arith.minsi %1, %c0_i32 : i32
    %c0_i32_0 = arith.constant 0 : i32
    %c0_i32_1 = arith.constant 0 : i32
    return %2, %c0_i32_0 : i32, i32
  }
  func.func @transform_2(%arg0: i32, %arg1: i32) -> (i32, i32) {
    %c1_i32 = arith.constant 1 : i32
    %0 = arith.muli %arg0, %c1_i32 : i32
    %1 = arith.addi %0, %arg1 : i32
    %c0_i32 = arith.constant 0 : i32
    %2 = arith.minsi %1, %c0_i32 : i32
    %c0_i32_0 = arith.constant 0 : i32
    %c0_i32_1 = arith.constant 0 : i32
    return %2, %c0_i32_0 : i32, i32
  }
  func.func @transform_3(%arg0: i32, %arg1: i32) -> (i32, i32) {
    %c0_i32 = arith.constant 0 : i32
    %c0_i32_0 = arith.constant 0 : i32
    return %c0_i32, %arg0 : i32, i32
  }
}

</mosaic_0001>

<llo_original>
// kernel: tpu_custom_call.1
$region0: #{tpu_custom_call.1}
  #allocation0 [shape = 'u32[]', space=smem, size = 0x4, offset = 0x4, fixed_abs, tag = 'smem constant byte address 0x4 - core index']
  #allocation1 [shape = 'u32[144,128]{1,0:T(1,128)}', space=vmem, size = 0x12000, scoped, tag = 'internal scratch']
  %s0 = inlined_call_operand.vmem [shape: f32[8,32], index: 0, kind: input, shape index: {}]
  %s1 = inlined_call_operand.vmem [shape: s32[8,1], index: 1, kind: input, shape index: {}]
  %s2 = inlined_call_operand.vmem [shape: f32[8,1], index: 2, kind: input, shape index: {}]
  %s3 = inlined_call_operand.hbm [shape: f32[1,256], index: 3, kind: output, shape index: {}]
  %s4 = sld [smem:[#allocation0]]
  $region49: #{tpu_custom_call.1} parent=0
    _
  %s6 = ssub.s32 1, %s4
  %s7 = scalar_select 0, %s6, %s4
  $region1: #{tpu_custom_call.1} parent=0
    #allocation2 [shape = 'u8[1024]{0}', space=vmem, size = 0x400, scoped, tag = 'output window, operand 0']
    #allocation3 [shape = 's32[2]{0}', space=sflag, size = 0x8, scoped, tag = 'scoped memory for tpu_custom_call.1']
    %8 = vsyncpa [#allocation3], 0
    %s9 = scalar_lea.sflag [#allocation3], 1
    %10 = vsyncpa %s9, 0
    loop: start=0, step=1, limit=4
    $region2: #{tpu_custom_call.1} parent=1 // loop_pre_header
      _
    $region3: #{tpu_custom_call.1} parent=1 // loop_header
      %s12 = sphi 0, %s16
      %p13 = scmp.ge.s32.totalorder %s12, 4
      %s19 = sphi 0, %s31
      %s20 = sphi 0, %s27
      %s21 = sphi 0, %s19
      %s22 = sphi 0, %s20
      %s23 = sphi 0, %s21
      %s24 = sphi 0, %s22
      %s40 = sphi 0, %s42
      %s43 = sphi 0, %s40
      %s44 = sphi 0, %s43
      %s60 = sphi 0, %s44
      %s72 = sphi 0, %s74
      %s75 = sphi 0, %s72
      %s76 = sphi 0, %s75
      %s92 = sphi 0, %s76
      %s104 = sphi 0, %s106
      %s107 = sphi 0, %s104
      %s108 = sphi 0, %s107
      %s124 = sphi 0, %s108
      %s130 = sphi 0, %s132
      %s133 = sphi 0, %s130
      %s134 = sphi 0, %s133
      %s150 = sphi 0, %s134
    $region4: #{tpu_custom_call.1} parent=1 // loop_header_branch
      %15 = sbr.rel (%p13) target = $region8
    $region5: #{tpu_custom_call.1} parent=1 // loop_body
      %s17 = ssub.s32 %s12, 1
      %s18 = ssub.s32 %s12, 2
      %s25 = sadd.s32 1, %s20
      %p26 = scmp.ge.s32.totalorder %s25, 1
      %s27 = scalar_select %p26, 0, %s25
      %s28 = sadd.s32 1, %s19
      %s29 = scalar_select %p26, %s28, %s19
      %p30 = scmp.ge.s32.totalorder %s29, 2
      %s31 = scalar_select %p30, 0, %s29
      %s32 = sadd.s32 %s19, %s20
      %p33 = scmp.lt.s32.totalorder %s32, 0
      %s34 = scalar_select %p33, %s32, 0
      %s35 = sadd.s32 %s31, %s27
      %p36 = scmp.lt.s32.totalorder %s35, 0
      %s37 = scalar_select %p36, %s35, 0
      %s38 = ssub.s32 %s34, %s37
      %p39 = scmp.eq.s32.totalorder %s38, 0
      %s41 = sadd.s32 %s40, 1
      %s42 = scalar_select %p39, %s40, %s41
      %p45 = pneg %p39
      %p46 = scmp.eq.s32.totalorder %s12, 1
      %p47 = por %p45, %p46
      %p48 = scmp.ne.s32.totalorder %s40, %s43
      %p49 = scmp.eq.s32.totalorder %s12, 0
      %p50 = por %p48, %p49
      %p51 = scmp.ne.s32.totalorder %s40, %s43
      %p52 = scmp.eq.s32.totalorder %s17, 1
      %p53 = por %p51, %p52
      %p54 = scmp.ne.s32.totalorder %s43, %s44
      %p55 = scmp.eq.s32.totalorder %s17, 0
      %p56 = por %p54, %p55
      %p57 = scmp.ne.s32.totalorder %s43, %s44
      %p58 = scmp.eq.s32.totalorder %s18, 1
      %p59 = por %p57, %p58
      %p61 = scmp.ne.s32.totalorder %s44, %s60
      %p62 = scmp.eq.s32.totalorder %s18, 0
      %p63 = por %p61, %p62
      %s64 = sadd.s32 %s19, %s20
      %p65 = scmp.lt.s32.totalorder %s64, 0
      %s66 = scalar_select %p65, %s64, 0
      %s67 = sadd.s32 %s31, %s27
      %p68 = scmp.lt.s32.totalorder %s67, 0
      %s69 = scalar_select %p68, %s67, 0
      %s70 = ssub.s32 %s66, %s69
      %p71 = scmp.eq.s32.totalorder %s70, 0
      %s73 = sadd.s32 %s72, 1
      %s74 = scalar_select %p71, %s72, %s73
      %p77 = pneg %p71
      %p78 = scmp.eq.s32.totalorder %s12, 1
      %p79 = por %p77, %p78
      %p80 = scmp.ne.s32.totalorder %s72, %s75
      %p81 = scmp.eq.s32.totalorder %s12, 0
      %p82 = por %p80, %p81
      %p83 = scmp.ne.s32.totalorder %s72, %s75
      %p84 = scmp.eq.s32.totalorder %s17, 1
      %p85 = por %p83, %p84
      %p86 = scmp.ne.s32.totalorder %s75, %s76
      %p87 = scmp.eq.s32.totalorder %s17, 0
      %p88 = por %p86, %p87
      %p89 = scmp.ne.s32.totalorder %s75, %s76
      %p90 = scmp.eq.s32.totalorder %s18, 1
      %p91 = por %p89, %p90
      %p93 = scmp.ne.s32.totalorder %s76, %s92
      %p94 = scmp.eq.s32.totalorder %s18, 0
      %p95 = por %p93, %p94
      %s96 = sadd.s32 %s19, %s20
      %p97 = scmp.lt.s32.totalorder %s96, 0
      %s98 = scalar_select %p97, %s96, 0
      %s99 = sadd.s32 %s31, %s27
      %p100 = scmp.lt.s32.totalorder %s99, 0
      %s101 = scalar_select %p100, %s99, 0
      %s102 = ssub.s32 %s98, %s101
      %p103 = scmp.eq.s32.totalorder %s102, 0
      %s105 = sadd.s32 %s104, 1
      %s106 = scalar_select %p103, %s104, %s105
      %p109 = pneg %p103
      %p110 = scmp.eq.s32.totalorder %s12, 1
      %p111 = por %p109, %p110
      %p112 = scmp.ne.s32.totalorder %s104, %s107
      %p113 = scmp.eq.s32.totalorder %s12, 0
      %p114 = por %p112, %p113
      %p115 = scmp.ne.s32.totalorder %s104, %s107
      %p116 = scmp.eq.s32.totalorder %s17, 1
      %p117 = por %p115, %p116
      %p118 = scmp.ne.s32.totalorder %s107, %s108
      %p119 = scmp.eq.s32.totalorder %s17, 0
      %p120 = por %p118, %p119
      %p121 = scmp.ne.s32.totalorder %s107, %s108
      %p122 = scmp.eq.s32.totalorder %s18, 1
      %p123 = por %p121, %p122
      %p125 = scmp.ne.s32.totalorder %s108, %s124
      %p126 = scmp.eq.s32.totalorder %s18, 0
      %p127 = por %p125, %p126
      %s128 = ssub.s32 %s19, %s31
      %p129 = scmp.eq.s32.totalorder %s128, 0
      %s131 = sadd.s32 %s130, 1
      %s132 = scalar_select %p129, %s130, %s131
      %p135 = pneg %p129
      %p136 = scmp.eq.s32.totalorder %s12, 1
      %p137 = por %p135, %p136
      %p138 = scmp.ne.s32.totalorder %s130, %s133
      %p139 = scmp.eq.s32.totalorder %s12, 0
      %p140 = por %p138, %p139
      %p141 = scmp.ne.s32.totalorder %s130, %s133
      %p142 = scmp.eq.s32.totalorder %s17, 1
      %p143 = por %p141, %p142
      %p144 = scmp.ne.s32.totalorder %s133, %s134
      %p145 = scmp.eq.s32.totalorder %s17, 0
      %p146 = por %p144, %p145
      %p147 = scmp.ne.s32.totalorder %s133, %s134
      %p148 = scmp.eq.s32.totalorder %s18, 1
      %p149 = por %p147, %p148
      %p151 = scmp.ne.s32.totalorder %s134, %s150
      %p152 = scmp.eq.s32.totalorder %s18, 0
      %p153 = por %p151, %p152
      %p154 = scmp.le.s32.totalorder 1, %s12
      %p155 = scmp.lt.s32.totalorder %s12, 3
      %p156 = pnand %p154, %p155
      %p157 = pneg %p156
      // Predicated region
      $region9: #{tpu_custom_call.1} parent=5 // pred_check
        _
      $region10: #{tpu_custom_call.1} parent=5 // pred_check_branch
        %159 = sbr.rel (%p156) target = $region12
      $region11: #{tpu_custom_call.1} parent=5 // pred_region
        %s160 = ssub.s32 %s12, 1
      $region12: #{tpu_custom_call.1} parent=5 // pred_fallthru
        _
      %p161 = scmp.lt.s32.totalorder %s12, 2
      // Predicated region
      $region13: #{tpu_custom_call.1} parent=5 // pred_check
        %p162 = pneg %p161
      $region14: #{tpu_custom_call.1} parent=5 // pred_check_branch
        %164 = sbr.rel (%p162) target = $region16
      $region15: #{tpu_custom_call.1} parent=5 // pred_region
        // Predicated region
        $region17: #{tpu_custom_call.1} parent=15 // pred_check
          %p165 = pneg %p50
        $region18: #{tpu_custom_call.1} parent=15 // pred_check_branch
          %167 = sbr.rel (%p165) target = $region20
        $region19: #{tpu_custom_call.1} parent=15 // pred_region
          %s168 = sadd.s32 %s19, %s20
          %p169 = scmp.lt.s32.totalorder %s168, 0
          %s170 = scalar_select %p169, %s168, 0
          %p171 = scmp.lt.s32.totalorder %s170, 0
          %s172 = scalar_select %p171, %s170, 0
          %s173 = smul.addr %s172, 8
          %s174 = scalar_lea.vmem %s0, %s173
          %s175 = sadd.s32 %s19, %s20
          %p176 = scmp.lt.s32.totalorder %s175, 0
          %s177 = scalar_select %p176, %s175, 0
        $region20: #{tpu_custom_call.1} parent=15 // pred_fallthru
          _
        // Predicated region
        $region21: #{tpu_custom_call.1} parent=15 // pred_check
          %p178 = pneg %p82
        $region22: #{tpu_custom_call.1} parent=15 // pred_check_branch
          %180 = sbr.rel (%p178) target = $region24
        $region23: #{tpu_custom_call.1} parent=15 // pred_region
          %s181 = sadd.s32 %s19, %s20
          %p182 = scmp.lt.s32.totalorder %s181, 0
          %s183 = scalar_select %p182, %s181, 0
          %p184 = scmp.lt.s32.totalorder %s183, 0
          %s185 = scalar_select %p184, %s183, 0
          %s186 = smul.addr %s185, 8
          %s187 = scalar_lea.vmem %s1, %s186
          %s188 = sadd.s32 %s19, %s20
          %p189 = scmp.lt.s32.totalorder %s188, 0
          %s190 = scalar_select %p189, %s188, 0
        $region24: #{tpu_custom_call.1} parent=15 // pred_fallthru
          _
        // Predicated region
        $region25: #{tpu_custom_call.1} parent=15 // pred_check
          %p191 = pneg %p114
        $region26: #{tpu_custom_call.1} parent=15 // pred_check_branch
          %193 = sbr.rel (%p191) target = $region28
        $region27: #{tpu_custom_call.1} parent=15 // pred_region
          %s194 = sadd.s32 %s19, %s20
          %p195 = scmp.lt.s32.totalorder %s194, 0
          %s196 = scalar_select %p195, %s194, 0
          %p197 = scmp.lt.s32.totalorder %s196, 0
          %s198 = scalar_select %p197, %s196, 0
          %s199 = smul.addr %s198, 8
          %s200 = scalar_lea.vmem %s2, %s199
          %s201 = sadd.s32 %s19, %s20
          %p202 = scmp.lt.s32.totalorder %s201, 0
          %s203 = scalar_select %p202, %s201, 0
        $region28: #{tpu_custom_call.1} parent=15 // pred_fallthru
          _
      $region16: #{tpu_custom_call.1} parent=5 // pred_fallthru
        _
      %p204 = scmp.le.s32.totalorder 1, %s12
      %p205 = scmp.lt.s32.totalorder %s12, 3
      %p206 = pnand %p204, %p205
      %p207 = pneg %p206
      // Predicated region
      $region29: #{tpu_custom_call.1} parent=5 // pred_check
        _
      $region30: #{tpu_custom_call.1} parent=5 // pred_check_branch
        %209 = sbr.rel (%p206) target = $region32
      $region31: #{tpu_custom_call.1} parent=5 // pred_region
        %s210 = ssub.s32 %s12, 1
        %s211 = sadd.s32 %s21, %s22
        %p212 = scmp.lt.s32.totalorder %s211, 0
        %s213 = scalar_select %p212, %s211, 0
        %p214 = scmp.lt.s32.totalorder %s213, 0
        %s215 = scalar_select %p214, %s213, 0
        %s216 = smul.addr %s215, 8
        %s217 = scalar_lea.vmem %s0, %s216
        %p218 = pneg %p56
        %p219 = pneg %p53
        %s220 = sadd.s32 %s21, %s22
        %p221 = scmp.lt.s32.totalorder %s220, 0
        %s222 = scalar_select %p221, %s220, 0
        %p223 = scmp.lt.s32.totalorder %s222, 0
        %s224 = scalar_select %p223, %s222, 0
        %s225 = smul.addr %s224, 8
        %s226 = scalar_lea.vmem %s1, %s225
        %p227 = pneg %p88
        %p228 = pneg %p85
        %s229 = sadd.s32 %s21, %s22
        %p230 = scmp.lt.s32.totalorder %s229, 0
        %s231 = scalar_select %p230, %s229, 0
        %p232 = scmp.lt.s32.totalorder %s231, 0
        %s233 = scalar_select %p232, %s231, 0
        %s234 = smul.addr %s233, 8
        %s235 = scalar_lea.vmem %s2, %s234
        %p236 = pneg %p120
        %p237 = pneg %p117
        %p238 = pneg %p146
        %p239 = pneg %p143
        %s240 = sand.u32 %s133, 1
        %s241 = scalar_lea.sflag [#allocation3], %s240
        %s242 = sand.u32 %s133, 1
        %s243 = scalar_lea.vmem [#allocation2], %s242
        %s244 = sadd.s32 %s21, %s22
        %p245 = scmp.lt.s32.totalorder %s244, 0
        %s246 = scalar_select %p245, %s244, 0
        %p247 = scmp.lt.s32.totalorder %s246, 0
        %s248 = scalar_select %p247, %s246, 0
        %s249 = smul.addr %s248, 8
        %s250 = scalar_lea.vmem %s0, %s249
        %s251 = sadd.s32 %s21, %s22
        %p252 = scmp.lt.s32.totalorder %s251, 0
        %s253 = scalar_select %p252, %s251, 0
        %s254 = sadd.s32 %s21, %s22
        %p255 = scmp.lt.s32.totalorder %s254, 0
        %s256 = scalar_select %p255, %s254, 0
        %p257 = scmp.lt.s32.totalorder %s256, 0
        %s258 = scalar_select %p257, %s256, 0
        %s259 = smul.addr %s258, 8
        %s260 = scalar_lea.vmem %s1, %s259
        %s261 = sadd.s32 %s21, %s22
        %p262 = scmp.lt.s32.totalorder %s261, 0
        %s263 = scalar_select %p262, %s261, 0
        %s264 = sadd.s32 %s21, %s22
        %p265 = scmp.lt.s32.totalorder %s264, 0
        %s266 = scalar_select %p265, %s264, 0
        %p267 = scmp.lt.s32.totalorder %s266, 0
        %s268 = scalar_select %p267, %s266, 0
        %s269 = smul.addr %s268, 8
        %s270 = scalar_lea.vmem %s2, %s269
        %s271 = sadd.s32 %s21, %s22
        %p272 = scmp.lt.s32.totalorder %s271, 0
        %s273 = scalar_select %p272, %s271, 0
        %v274 = vld [vmem:[%s250] sm:$0xff]
        %v275 = vld [vmem:[%s260] sm:$0xff]
        %v276 = vld [vmem:[%s270] sm:$0xff]
        %vm277 = vcmask 261120
        %v278 = vsel %vm277, %v274, -inf
        %279 = vmax.xlane.f32.xlu0 %v278
        %v280 = vpop.xlane.xlu0 %279
        %v281 = vsub.f32 %v274, %v280
        %v282 = vmul.f32 %v281, 1.442695
        %v283 = vpow.pop %v282
        %v284 = vsel %vm277, %v283, 0.0
        %285 = vadd.xlane.f32.xlu0 %v284
        %v286 = vpop.xlane.xlu0 %285
        %v287 = vlog2.pop %v286
        %v288 = vmul.f32 %v287, 0.6931472
        %v289 = vlaneseq
        %v290 = vand.u32 %v289, 127
        %291 = vset.pattern.permute.xlu0 0
        %292 = vperm.xlu0 %291, %v275
        %v293 = vpop.permute.xlu0 %292
        %vm294 = vcmp.eq.s32.totalorder %v290, %v293
        %v295 = vsel %vm294, %v281, 0.0
        %v296 = vsel %vm277, %v295, 0.0
        %297 = vadd.xlane.f32.xlu0 %v296
        %v298 = vpop.xlane.xlu0 %297
        %v299 = vmul.f32 %v276, 1.442695
        %v300 = vpow.pop %v299
        %v301 = vmul.f32 %v300, 0.5
        %v302 = vsub.f32 %v301, 0.3
        %v303 = vsub.f32 0.0, %v302
        %v304 = vsub.f32 %v298, %v288
        %v305 = vmul.f32 %v303, %v304
        %s306 = sadd.s32 %s21, %s22
        %s307 = smul.u32 %s306, 8
        %v308 = vlaneseq
        %v309 = vshrl.u32 %v308, 7
        %v310 = vstv %s307
        %v311 = vadd.s32 %v310, %v309
        %vm312 = vcmp.lt.s32.totalorder %v311, 8
        %v313 = vsel %vm312, %v305, 0.0
        %p314 = scmp.eq.s32.totalorder %s22, 0
        // Predicated region
        $region33: #{tpu_custom_call.1} parent=31 // pred_check
          %p315 = pneg %p314
        $region34: #{tpu_custom_call.1} parent=31 // pred_check_branch
          %317 = sbr.rel (%p315) target = $region36
        $region35: #{tpu_custom_call.1} parent=31 // pred_region
          %318 = vst [vmem:[%s243] sm:$0x1] 0.0
        $region36: #{tpu_custom_call.1} parent=31 // pred_fallthru
          _
        %v319 = vld [vmem:[%s243] sm:$0x1]
        %vm320 = vcmask 7168
        %v321 = vsel %vm320, %v313, 0.0
        %322 = vadd.xlane.f32.xlu0 %v321
        %v323 = vpop.xlane.xlu0 %322
        %v324 = vrot.slane %v323, 4
        %v325 = vadd.f32 %v323, %v324
        %v326 = vrot.slane %v325, 2
        %v327 = vadd.f32 %v325, %v326
        %v328 = vrot.slane %v327, 1
        %v329 = vadd.f32 %v327, %v328
        %s330 = vtos %v329
        %v331 = vstv %s330
        %v332 = vadd.f32 %v319, %v331
        %333 = vst [vmem:[%s243] sm:$0x1] %v332
        %s334 = sand.u32 %s133, 1
        %s335 = scalar_lea.sflag [#allocation3], %s334
        %s336 = sand.u32 %s133, 1
        %s337 = scalar_lea.vmem [#allocation2], %s336
        // Predicated region
        $region37: #{tpu_custom_call.1} parent=31 // pred_check
          %p338 = pneg %p143
        $region38: #{tpu_custom_call.1} parent=31 // pred_check_branch
          %340 = sbr.rel (%p338) target = $region40
        $region39: #{tpu_custom_call.1} parent=31 // pred_region
          %s342 = ssub.s32 16, 16
          %343 = vsyncadd %s335, %s342
          %s344 = smul.addr %s21, 16
          %s345 = scalar_lea.hbm %s3, %s344
          %s347 = sshll.u32 %s337, 4
          %s348 = int_to_ptr.vmem [resolvable:$true] %s347
          %350 = dma.vmem_to_hbm [thread:$0]  %s348, 16, %s345, %s335
        $region40: #{tpu_custom_call.1} parent=31 // pred_fallthru
          _
      $region32: #{tpu_custom_call.1} parent=5 // pred_fallthru
        _
      %p351 = scmp.le.s32.totalorder 2, %s12
      // Predicated region
      $region41: #{tpu_custom_call.1} parent=5 // pred_check
        %p352 = pneg %p351
      $region42: #{tpu_custom_call.1} parent=5 // pred_check_branch
        %354 = sbr.rel (%p352) target = $region44
      $region43: #{tpu_custom_call.1} parent=5 // pred_region
        %s355 = ssub.s32 %s12, 2
        // Predicated region
        $region45: #{tpu_custom_call.1} parent=43 // pred_check
          %p356 = pneg %p149
        $region46: #{tpu_custom_call.1} parent=43 // pred_check_branch
          %358 = sbr.rel (%p356) target = $region48
        $region47: #{tpu_custom_call.1} parent=43 // pred_region
          %s359 = sand.u32 %s134, 1
          %s360 = scalar_lea.sflag [#allocation3], %s359
          %s361 = sand.u32 %s134, 1
          %s362 = scalar_lea.vmem [#allocation2], %s361
          %363 = dma.done %s360, 16
        $region48: #{tpu_custom_call.1} parent=43 // pred_fallthru
          _
      $region44: #{tpu_custom_call.1} parent=5 // pred_fallthru
        _
    $region6: #{tpu_custom_call.1} parent=1 // loop_footer
      %s16 = sadd.s32 1, %s12
    $region7: #{tpu_custom_call.1} parent=1 // loop_footer_branch
      %11 = sbr.rel target = $region3
    $region8: #{tpu_custom_call.1} parent=1 // loop_exit
      _
    %364 = vsyncpa [#allocation3], 1
    %s365 = scalar_lea.sflag [#allocation3], 1
    %366 = vsyncpa %s365, 1

</llo_original>
